<compile_context>
chip_gen: v6e
topology: v6e:2x2x1
jax: 0.10.0
libtpu: 0.0.40
codegen_flags: <defaults>
</compile_context>

<pallas_src>
import functools

import jax
import jax.numpy as jnp
import numpy as np
from jax.experimental import pallas as pl
from jax.experimental.pallas import tpu as pltpu


# ---------------------------------------------------------------------------
# Pallas kernel
# ---------------------------------------------------------------------------
def frn_kernel(x_ref, p_ref, o_ref, *, eps, inv_hw):
    # x_ref: (TM, HW)  rows = (n, c) pairs, lanes = flattened spatial extent
    # p_ref: (TM, 3)   columns = [gamma, beta, t] per row
    x = x_ref[...].astype(jnp.float32)                       # stats always in f32
    nu2 = jnp.sum(x * x, axis=-1, keepdims=True) * inv_hw    # per-row E[x^2]
    xn = x * jax.lax.rsqrt(nu2 + eps)                        # EUP rsqrt
    g = p_ref[:, 0:1]
    b = p_ref[:, 1:2]
    t = p_ref[:, 2:3]
    o_ref[...] = jnp.maximum(g * xn + b, t).astype(o_ref.dtype)


# ---------------------------------------------------------------------------
# Tiling / VMEM planning
# ---------------------------------------------------------------------------
def _vmem_plan():
    # Generation-safe plan: fits v7x (64 MiB / TensorCore) with headroom while
    # still using far more than the 16/32 MiB scoped defaults on v5e/v6e.
    vmem_limit = 48 * 1024 * 1024
    tile_budget = 28 * 1024 * 1024
    try:
        cap = int(getattr(pltpu.get_tpu_info(), "vmem_capacity_bytes", 0))
    except Exception:
        cap = 0
    if cap and cap < 96 * 1024 * 1024:
        # Small-VMEM part (v7x-class, 64 MiB per TC): leave extra headroom.
        vmem_limit = min(vmem_limit, int(0.75 * cap))
        tile_budget = min(tile_budget, int(0.5 * cap))
    return tile_budget, vmem_limit


def _choose_tm(nc, hw, in_item, out_item, budget_bytes):
    if nc <= 8:
        return nc  # block row-dim equals the full array dim -> always legal
    # Per row in flight: double-buffered (in + out) tile rows + lane-padded params.
    per_row = 2 * hw * (in_item + out_item) + 2 * 128 * 4
    tm = budget_bytes // max(per_row, 1)
    tm = max(8, (tm // 8) * 8)
    # Cap so the "parallel" grid has >= 2 steps (v7x has 2 TensorCores).
    cap = max(8, ((-(-nc // 2)) + 7) // 8 * 8)   # round_up8(cdiv(nc, 2))
    return min(tm, cap)
    # TODO(synk): if HW is so large that even a TM=8 tile overflows the VMEM
    # budget, add an inner HW pipeline (sweep 1: accumulate sum(x^2); sweep 2:
    # normalize + store). Not needed for typical FRN feature-map sizes.


# ---------------------------------------------------------------------------
# Wrapper
# ---------------------------------------------------------------------------
def frn_forward(x_nchw, gamma, beta, t, eps=1e-6):
    """x_nchw: (N, C, H, W); gamma/beta/t: (1, C, 1, 1). Returns (N, C, H, W)."""
    N, C, H, W = x_nchw.shape
    NC, HW = N * C, H * W

    # Contiguous reshape (no transpose, no data movement): rows are (n, c).
    x2d = x_nchw.reshape(NC, HW)

    # One merged (NC, 3) parameter side input: row r -> channel r % C.
    p = jnp.stack(
        [gamma.reshape(C), beta.reshape(C), t.reshape(C)], axis=-1
    ).astype(jnp.float32)                     # (C, 3)
    p_rows = jnp.tile(p, (N, 1))              # (NC, 3), tiny

    in_item = x2d.dtype.itemsize
    out_item = in_item
    tile_budget, vmem_limit = _vmem_plan()
    TM = _choose_tm(NC, HW, in_item, out_item, tile_budget)

    # No activation padding: boundary blocks are masked by Pallas; rows are
    # fully independent so a ragged last tile cannot affect valid rows.
    grid = (pl.cdiv(NC, TM),)

    cost = pl.CostEstimate(
        flops=5 * NC * HW,
        transcendentals=NC,
        bytes_accessed=NC * HW * (in_item + out_item) + NC * 3 * 4,
    )

    out2d = pl.pallas_call(
        functools.partial(frn_kernel, eps=float(eps), inv_hw=1.0 / HW),
        out_shape=jax.ShapeDtypeStruct((NC, HW), x2d.dtype),
        grid=grid,
        in_specs=[
            pl.BlockSpec((TM, HW), lambda i: (i, 0)),   # activation tile (lane-dense)
            pl.BlockSpec((TM, 3), lambda i: (i, 0)),    # [gamma, beta, t] per row
        ],
        out_specs=pl.BlockSpec((TM, HW), lambda i: (i, 0)),
        compiler_params=pltpu.CompilerParams(
            dimension_semantics=("parallel",),          # rows are independent
            vmem_limit_bytes=vmem_limit,
        ),
        cost_estimate=cost,
    )(x2d, p_rows)

    return out2d.reshape(N, C, H, W)


# ---------------------------------------------------------------------------
# Pure-JAX reference (matches the PyTorch forward)
# ---------------------------------------------------------------------------
def ref_frn(x, gamma, beta, t, eps=1e-6):
    nu2 = jnp.mean(jnp.square(x), axis=(2, 3), keepdims=True)
    xn = x * jax.lax.rsqrt(nu2 + eps)
    return jnp.maximum(gamma * xn + beta, t)


# ---------------------------------------------------------------------------
if __name__ == "__main__":
    eps = 1e-6
    root = jax.random.PRNGKey(0)

    def make_inputs(key, N, C, H, W, dtype):
        kx, kg, kb, kt = jax.random.split(key, 4)
        x = jax.random.normal(kx, (N, C, H, W), dtype=jnp.float32).astype(dtype)
        gamma = 1.0 + 0.1 * jax.random.normal(kg, (1, C, 1, 1), dtype=jnp.float32)
        beta = 0.1 * jax.random.normal(kb, (1, C, 1, 1), dtype=jnp.float32)
        t = 0.1 * jax.random.normal(kt, (1, C, 1, 1), dtype=jnp.float32)
        return x, gamma, beta, t

    cases = [
        ((2, 4, 16, 16), jnp.float32, 1e-4),   # shapes implied by the module
        ((3, 5, 8, 16), jnp.float32, 1e-4),    # NC=15 % TM=8 != 0 -> boundary block path
        ((2, 4, 16, 16), jnp.bfloat16, 6e-2),  # bf16 I/O with f32 statistics
    ]

    for idx, (shape, dtype, tol) in enumerate(cases):
        N, C, H, W = shape
        x, gamma, beta, t = make_inputs(jax.random.fold_in(root, idx), N, C, H, W, dtype)
        out = jax.block_until_ready(frn_forward(x, gamma, beta, t, eps))
        ref = ref_frn(x.astype(jnp.float32), gamma, beta, t, eps)
        assert out.shape == shape, (out.shape, shape)
        assert out.dtype == dtype, (out.dtype, dtype)
        out_f = np.asarray(out.astype(jnp.float32))
        ref_f = np.asarray(ref)
        err = float(np.max(np.abs(out_f - ref_f)))
        assert err <= tol, (shape, str(dtype), err)

    print("KERNEL_OK")
</pallas_src>

<mosaic_0001>
module attributes {stable_mosaic.version = 11 : i64} {
  func.func @frn_kernel(%arg0: i32, %arg1: memref<8x256xf32, #tpu.memory_space<vmem>>, %arg2: memref<8x3xf32, #tpu.memory_space<vmem>>, %arg3: memref<8x256xf32, #tpu.memory_space<vmem>>) attributes {dimension_semantics = [#tpu.dimension_semantics<parallel>], iteration_bounds = array<i64: 1>, scalar_prefetch = 0 : i64, scratch_operands = 0 : i64, tpu.core_type = #tpu.core_type<tc>, window_params = [{transform_indices = @transform_0, window_bounds = array<i64: 8, 256>}, {transform_indices = @transform_1, window_bounds = array<i64: 8, 3>}, {transform_indices = @transform_2, window_bounds = array<i64: 8, 256>}]} {
    %c0 = arith.constant 0 : index
    %c0_0 = arith.constant 0 : index
    %0 = vector.load %arg1[%c0, %c0_0] : memref<8x256xf32, #tpu.memory_space<vmem>>, vector<8x256xf32>
    %1 = arith.mulf %0, %0 : vector<8x256xf32>
    %cst = arith.constant dense<0.000000e+00> : vector<8xf32>
    %2 = vector.multi_reduction <add>, %1, %cst [1] : vector<8x256xf32> to vector<8xf32>
    %3 = vector.shape_cast %2 : vector<8xf32> to vector<8x1xf32>
    %cst_1 = arith.constant 3.906250e-03 : f32
    %4 = vector.broadcast %cst_1 : f32 to vector<8x1xf32>
    %5 = arith.mulf %3, %4 : vector<8x1xf32>
    %cst_2 = arith.constant 9.99999997E-7 : f32
    %6 = vector.broadcast %cst_2 : f32 to vector<8x1xf32>
    %7 = arith.addf %5, %6 : vector<8x1xf32>
    %8 = math.rsqrt %7 : vector<8x1xf32>
    %9 = vector.broadcast %8 : vector<8x1xf32> to vector<8x256xf32>
    %10 = arith.mulf %0, %9 : vector<8x256xf32>
    %c0_3 = arith.constant 0 : index
    %c0_4 = arith.constant 0 : index
    %11 = vector.load %arg2[%c0_3, %c0_4] : memref<8x3xf32, #tpu.memory_space<vmem>>, vector<8x1xf32>
    %c0_5 = arith.constant 0 : index
    %c1 = arith.constant 1 : index
    %12 = vector.load %arg2[%c0_5, %c1] : memref<8x3xf32, #tpu.memory_space<vmem>>, vector<8x1xf32>
    %c0_6 = arith.constant 0 : index
    %c2 = arith.constant 2 : index
    %13 = vector.load %arg2[%c0_6, %c2] : memref<8x3xf32, #tpu.memory_space<vmem>>, vector<8x1xf32>
    %14 = vector.broadcast %11 : vector<8x1xf32> to vector<8x256xf32>
    %15 = arith.mulf %14, %10 : vector<8x256xf32>
    %16 = vector.broadcast %12 : vector<8x1xf32> to vector<8x256xf32>
    %17 = arith.addf %15, %16 : vector<8x256xf32>
    %18 = vector.broadcast %13 : vector<8x1xf32> to vector<8x256xf32>
    %19 = arith.maximumf %17, %18 : vector<8x256xf32>
    %c0_7 = arith.constant 0 : index
    %c0_8 = arith.constant 0 : index
    %20 = vector.load %arg3[%c0_7, %c0_8] : memref<8x256xf32, #tpu.memory_space<vmem>>, vector<8x256xf32>
    tpu.vector_store %arg3[%c0_7, %c0_8], %19 {strides = array<i32>} : memref<8x256xf32, #tpu.memory_space<vmem>>, vector<8x256xf32>,
    return
  }
  func.func @transform_0(%arg0: i32) -> (i32, i32) {
    %c0_i32 = arith.constant 0 : i32
    %c0_i32_0 = arith.constant 0 : i32
    return %arg0, %c0_i32 : i32, i32
  }
  func.func @transform_1(%arg0: i32) -> (i32, i32) {
    %c0_i32 = arith.constant 0 : i32
    %c0_i32_0 = arith.constant 0 : i32
    return %arg0, %c0_i32 : i32, i32
  }
  func.func @transform_2(%arg0: i32) -> (i32, i32) {
    %c0_i32 = arith.constant 0 : i32
    %c0_i32_0 = arith.constant 0 : i32
    return %arg0, %c0_i32 : i32, i32
  }
}

</mosaic_0001>

<llo_original>
// kernel: tpu_custom_call.1
$region0: #{tpu_custom_call.1}
  #allocation0 [shape = 'u32[]', space=smem, size = 0x4, offset = 0x4, fixed_abs, tag = 'smem constant byte address 0x4 - core index']
  #allocation1 [shape = 'u32[144,128]{1,0:T(1,128)}', space=vmem, size = 0x12000, scoped, tag = 'internal scratch']
  %s0 = inlined_call_operand.hbm [shape: f32[8,256], index: 0, kind: input, shape index: {}]
  %s1 = inlined_call_operand.vmem [shape: f32[8,3], index: 1, kind: input, shape index: {}]
  %s2 = inlined_call_operand.hbm [shape: f32[8,256], index: 2, kind: output, shape index: {}]
  %s3 = sld [smem:[#allocation0]]
  $region22: #{tpu_custom_call.1} parent=0
    _
  %s5 = ssub.s32 1, %s3
  %s6 = scalar_select 0, %s5, %s3
  $region1: #{tpu_custom_call.1} parent=0
    #allocation2 [shape = 'u8[8192]{0}', space=vmem, size = 0x2000, scoped, tag = 'input window, operand 0, single buffered']
    #allocation3 [shape = 's32[1]{0}', space=sflag, size = 0x4, scoped, tag = 'scoped memory for tpu_custom_call.1']
    #allocation4 [shape = 's32[1]{0}', space=sflag, size = 0x4, scoped, tag = 'scoped memory for tpu_custom_call.1']
    #allocation5 [shape = 'u8[8192]{0}', space=vmem, size = 0x2000, scoped, tag = 'output window, operand 0, single buffered']
    %7 = vsyncpa [#allocation3], 0
    %8 = vsyncpa [#allocation4], 0
    // Predicated region
    $region2: #{tpu_custom_call.1} parent=1 // pred_check
      _
    $region3: #{tpu_custom_call.1} parent=1 // pred_check_branch
      %10 = sbr.rel (0) target = $region5
    $region4: #{tpu_custom_call.1} parent=1 // pred_region
      %s12 = ssub.s32 256, 256
      %13 = vsyncadd [#allocation3], %s12
      %s15 = sshll.u32 [#allocation2], 4
      %s16 = int_to_ptr.vmem [resolvable:$true] %s15
      %18 = dma.hbm_to_vmem [thread:$0]  %s0, 256, %s16, [#allocation3]
    $region5: #{tpu_custom_call.1} parent=1 // pred_fallthru
      _
    // Predicated region
    $region6: #{tpu_custom_call.1} parent=1 // pred_check
      _
    $region7: #{tpu_custom_call.1} parent=1 // pred_check_branch
      %20 = sbr.rel (0) target = $region9
    $region8: #{tpu_custom_call.1} parent=1 // pred_region
      _
    $region9: #{tpu_custom_call.1} parent=1 // pred_fallthru
      _
    // Predicated region
    $region10: #{tpu_custom_call.1} parent=1 // pred_check
      _
    $region11: #{tpu_custom_call.1} parent=1 // pred_check_branch
      %22 = sbr.rel (0) target = $region13
    $region12: #{tpu_custom_call.1} parent=1 // pred_region
      %23 = dma.done [#allocation3], 256
    $region13: #{tpu_custom_call.1} parent=1 // pred_fallthru
      _
    %v24 = vld [vmem:[#allocation2] sm:$0xff]
    %v25 = vld [vmem:[#allocation2 + $0x8] sm:$0xff]
    %v26 = vmul.f32 %v24, %v24
    %v27 = vmul.f32 %v25, %v25
    %v28 = vadd.f32 %v26, %v27
    %29 = vadd.xlane.f32.xlu0 %v28
    %v30 = vpop.xlane.xlu0 %29
    %v31 = vmul.f32 %v30, 0.00390625
    %v32 = vadd.f32 %v31, 1e-06
    %v33 = vrsqrt.pop %v32
    %v34 = vmul.f32 %v24, %v33
    %v35 = vmul.f32 %v25, %v33
    %v36 = vld [vmem:[%s1] sm:$0xff]
    %38 = vset.pattern.permute.xlu0 0
    %39 = vperm.xlu0 %38, %v36
    %v40 = vpop.permute.xlu0 %39
    %v42 = vmul.f32 %v40, %v34
    %v43 = vmul.f32 %v40, %v35
    %44 = vset.pattern.permute.xlu0 1
    %45 = vperm.xlu0 %44, %v36
    %v46 = vpop.permute.xlu0 %45
    %v48 = vadd.f32 %v42, %v46
    %v49 = vadd.f32 %v43, %v46
    %50 = vset.pattern.permute.xlu0 2
    %51 = vperm.xlu0 %50, %v36
    %v52 = vpop.permute.xlu0 %51
    %v54 = vmax.f32 %v48, %v52
    %v55 = vmax.f32 %v49, %v52
    %56 = vst [vmem:[#allocation5] sm:$0xff] %v54
    %57 = vst [vmem:[#allocation5 + $0x8] sm:$0xff] %v55
    // Predicated region
    $region14: #{tpu_custom_call.1} parent=1 // pred_check
      _
    $region15: #{tpu_custom_call.1} parent=1 // pred_check_branch
      %59 = sbr.rel (0) target = $region17
    $region16: #{tpu_custom_call.1} parent=1 // pred_region
      %s61 = ssub.s32 256, 256
      %62 = vsyncadd [#allocation4], %s61
      %s64 = sshll.u32 [#allocation5], 4
      %s65 = int_to_ptr.vmem [resolvable:$true] %s64
      %67 = dma.vmem_to_hbm [thread:$0]  %s65, 256, %s2, [#allocation4]
    $region17: #{tpu_custom_call.1} parent=1 // pred_fallthru
      _
    // Predicated region
    $region18: #{tpu_custom_call.1} parent=1 // pred_check
      _
    $region19: #{tpu_custom_call.1} parent=1 // pred_check_branch
      %69 = sbr.rel (0) target = $region21
    $region20: #{tpu_custom_call.1} parent=1 // pred_region
      %70 = dma.done [#allocation4], 256
    $region21: #{tpu_custom_call.1} parent=1 // pred_fallthru
      _
    %71 = vsyncpa [#allocation3], 1
    %72 = vsyncpa [#allocation4], 1

</llo_original>
